<compile_context>
chip_gen: v6e
topology: v6e:2x2x1
jax: 0.10.0
libtpu: 0.0.40
codegen_flags: <defaults>
</compile_context>

<pallas_src>
import functools

import jax
import jax.numpy as jnp
from jax.experimental import pallas as pl
from jax.experimental.pallas import tpu as pltpu

LANES = 128
SUBLANES = 8
_TARGET_BLOCK_BYTES = 512 * 1024  # per-input, per-buffer DMA target


def _round_up(x, m):
    return ((x + m - 1) // m) * m


def _default_num_parts():
    """2 partitions only on v7x (2 TensorCores per chip); 1 on v5e/v6e."""
    try:
        kind = jax.devices()[0].device_kind.lower()
    except Exception:
        return 1
    return 2 if "v7" in kind else 1


def _rms_partial_kernel(p_ref, t_ref, o_ref, *, block_rows, steps_per_part,
                        nblocks, valid_rows, has_ragged, has_overcoverage):
    """Accumulate partial sums of (p - t)^2 into the resident (8, 128) block."""
    c = pl.program_id(0)   # partition ("parallel" axis; megacore shard on v7x)
    i = pl.program_id(1)   # reduction step within the partition ("arbitrary")
    blk = c * steps_per_part + i   # unclamped global block index

    @pl.when(i == 0)
    def _init():
        o_ref[...] = jnp.zeros_like(o_ref)

    def accumulate(masked):
        d = p_ref[...].astype(jnp.float32) - t_ref[...].astype(jnp.float32)
        sq = d * d
        if masked:
            row_ids = blk * block_rows + jax.lax.broadcasted_iota(
                jnp.int32, sq.shape, 0)
            sq = jnp.where(row_ids < valid_rows, sq, 0.0)
        # (block_rows,128) -> (block_rows//8, 8, 128) stays (8,128)-tile
        # aligned; the sum over axis 0 is pure vreg-wise VPU adds, and the
        # resident accumulator is a single vreg (4 KiB).
        o_ref[...] += sq.reshape(-1, SUBLANES, LANES).sum(axis=0)

    last_blk = nblocks - 1
    if has_ragged:
        # Full blocks: no masking cost at all.
        @pl.when(blk < last_blk)
        def _full():
            accumulate(masked=False)

        # Only the single ragged block pays for iota/cmp/select.
        @pl.when(blk == last_blk)
        def _ragged():
            accumulate(masked=True)
        # blk > last_blk (duplicated clamped coverage): skipped entirely.
    elif has_overcoverage:
        @pl.when(blk < nblocks)
        def _real():
            accumulate(masked=False)
    else:
        accumulate(masked=False)


def rms_loss(predictions, targets, *, block_rows=None, num_parts=None):
    """Pallas equivalent of RMSLoss.forward: sqrt(mean((pred - target) ** 2))."""
    assert predictions.shape == targets.shape, "shapes must match (no broadcasting)"
    total_n = int(predictions.size)
    assert total_n > 0

    # Flatten (free for contiguous tensors); stream in native dtype.
    p = predictions.reshape(-1)
    t = targets.reshape(-1)

    # Only the 128-aligned prefix streams through the kernel; the (<128) tail
    # is folded in with plain JAX instead of padding full copies of both inputs.
    rows = total_n // LANES
    aligned_n = rows * LANES
    tail_sq = jnp.float32(0.0)
    if aligned_n < total_n:
        dtail = (p[aligned_n:].astype(jnp.float32)
                 - t[aligned_n:].astype(jnp.float32))
        tail_sq = jnp.sum(dtail * dtail)
    if rows == 0:
        # Fewer than 128 elements total: nothing lane-dense for the kernel.
        return jnp.sqrt(tail_sq / jnp.float32(total_n))

    p2 = p[:aligned_n].reshape(rows, LANES)
    t2 = t[:aligned_n].reshape(rows, LANES)

    # Tile sizing: >= _TARGET_BLOCK_BYTES of input per buffer, rounded to the
    # sublane-packing multiple for the streamed dtype (8 f32, 16 bf16, 32 i8).
    itemsize = max(jnp.dtype(predictions.dtype).itemsize,
                   jnp.dtype(targets.dtype).itemsize)
    row_align = SUBLANES * max(1, 4 // itemsize)
    if block_rows is None:
        block_rows = max(row_align, _TARGET_BLOCK_BYTES // (LANES * itemsize))
    rows_rounded = _round_up(rows, row_align)
    block_rows = max(row_align,
                     min(_round_up(block_rows, row_align), rows_rounded))

    nblocks = pl.cdiv(rows, block_rows)
    if num_parts is None:
        num_parts = _default_num_parts()
    num_parts = max(1, min(num_parts, nblocks))
    steps_per_part = pl.cdiv(nblocks, num_parts)

    has_ragged = (rows % block_rows) != 0
    has_overcoverage = (num_parts * steps_per_part) != nblocks

    def in_map(c, i):
        # Clamp so trailing over-coverage re-reads the last real block; its
        # contribution is skipped/masked inside the kernel.
        return (jnp.minimum(c * steps_per_part + i, nblocks - 1), 0)

    kernel = functools.partial(
        _rms_partial_kernel,
        block_rows=block_rows,
        steps_per_part=steps_per_part,
        nblocks=nblocks,
        valid_rows=rows,
        has_ragged=has_ragged,
        has_overcoverage=has_overcoverage,
    )

    partials = pl.pallas_call(
        kernel,
        out_shape=jax.ShapeDtypeStruct((num_parts * SUBLANES, LANES),
                                       jnp.float32),
        grid_spec=pltpu.PrefetchScalarGridSpec(
            num_scalar_prefetch=0,
            grid=(num_parts, steps_per_part),
            in_specs=[
                pl.BlockSpec((block_rows, LANES), in_map),
                pl.BlockSpec((block_rows, LANES), in_map),
            ],
            out_specs=pl.BlockSpec((SUBLANES, LANES), lambda c, i: (c, 0)),
        ),
        # TODO(synk): on v7x, verify in a profile that grid axis 0 actually
        # shards across both TensorCores; if not, switch it to CORE_PARALLEL.
        compiler_params=pltpu.CompilerParams(
            dimension_semantics=("parallel", "arbitrary"),
        ),
    )(p2, t2)

    # Tiny follow-on reduce (<= num_parts * 4 KiB) + sqrt(mean) outside the loop.
    return jnp.sqrt((jnp.sum(partials) + tail_sq) / jnp.float32(total_n))


if __name__ == "__main__":
    key = jax.random.PRNGKey(0)
    k1, k2 = jax.random.split(key)
    shape = (2, 4, 16, 16)  # batch=2, channels=4, spatial=16x16
    predictions = jax.random.normal(k1, shape, dtype=jnp.float32)
    targets = jax.random.normal(k2, shape, dtype=jnp.float32)

    rms = rms_loss(predictions, targets)
    jax.block_until_ready(rms)

    ref = jnp.sqrt(jnp.mean((predictions - targets) ** 2))
    assert jnp.allclose(rms, ref, rtol=1e-5, atol=1e-6), (rms, ref)

    # Exercise the other code paths at small sizes:
    #   * ragged <128 tail in JAX + ragged last block masked in-kernel,
    #   * forced 2-partition axis with over-coverage + clamped-block skip,
    #   * multi-step reduction axis with no masking at all.
    cases = [
        ((2, 3, 17, 13), dict()),                               # tail + ragged block
        ((2, 4, 128, 128), dict(block_rows=384, num_parts=2)),  # 3 blocks, 2 parts
        ((2, 4, 128, 128), dict(block_rows=128, num_parts=2)),  # even split, multi-step
        ((1, 5, 16, 16), dict(block_rows=8, num_parts=2)),      # tiny, forced parts
    ]
    for idx, (extra_shape, kwargs) in enumerate(cases):
        ka, kb = jax.random.split(jax.random.PRNGKey(idx + 1))
        a = jax.random.normal(ka, extra_shape, dtype=jnp.float32)
        b = jax.random.normal(kb, extra_shape, dtype=jnp.float32)
        got = rms_loss(a, b, **kwargs)
        jax.block_until_ready(got)
        want = jnp.sqrt(jnp.mean((a - b) ** 2))
        assert jnp.allclose(got, want, rtol=1e-5, atol=1e-6), (
            extra_shape, kwargs, got, want)

    print("KERNEL_OK")
</pallas_src>

<mosaic_0001>
module attributes {stable_mosaic.version = 11 : i64} {
  func.func @_rms_partial_kernel(%arg0: i32, %arg1: i32, %arg2: memref<16x128xf32, #tpu.memory_space<vmem>>, %arg3: memref<16x128xf32, #tpu.memory_space<vmem>>, %arg4: memref<8x128xf32, #tpu.memory_space<vmem>>) attributes {dimension_semantics = [#tpu.dimension_semantics<parallel>, #tpu.dimension_semantics<arbitrary>], iteration_bounds = array<i64: 1, 1>, scalar_prefetch = 0 : i64, scratch_operands = 0 : i64, tpu.core_type = #tpu.core_type<tc>, window_params = [{transform_indices = @transform_0, window_bounds = array<i64: 16, 128>}, {transform_indices = @transform_1, window_bounds = array<i64: 16, 128>}, {transform_indices = @transform_2, window_bounds = array<i64: 8, 128>}]} {
    %c0_i32 = arith.constant 0 : i32
    %0 = arith.cmpi eq, %arg1, %c0_i32 : i32
    %1 = arith.extui %0 : i1 to i32
    %c0_i32_0 = arith.constant 0 : i32
    %2 = arith.cmpi ne, %1, %c0_i32_0 : i32
    scf.if %2 {
      %cst_8 = arith.constant 0.000000e+00 : f32
      %12 = vector.broadcast %cst_8 : f32 to vector<8x128xf32>
      %c0_9 = arith.constant 0 : index
      %c0_10 = arith.constant 0 : index
      %13 = vector.load %arg4[%c0_9, %c0_10] : memref<8x128xf32, #tpu.memory_space<vmem>>, vector<8x128xf32>
      tpu.vector_store %arg4[%c0_9, %c0_10], %12 {strides = array<i32>} : memref<8x128xf32, #tpu.memory_space<vmem>>, vector<8x128xf32>,
    } else {
    }
    %c0 = arith.constant 0 : index
    %c0_1 = arith.constant 0 : index
    %3 = vector.load %arg2[%c0, %c0_1] : memref<16x128xf32, #tpu.memory_space<vmem>>, vector<16x128xf32>
    %c0_2 = arith.constant 0 : index
    %c0_3 = arith.constant 0 : index
    %4 = vector.load %arg3[%c0_2, %c0_3] : memref<16x128xf32, #tpu.memory_space<vmem>>, vector<16x128xf32>
    %5 = arith.subf %3, %4 : vector<16x128xf32>
    %6 = arith.mulf %5, %5 : vector<16x128xf32>
    %c0_4 = arith.constant 0 : index
    %c0_5 = arith.constant 0 : index
    %7 = vector.load %arg4[%c0_4, %c0_5] : memref<8x128xf32, #tpu.memory_space<vmem>>, vector<8x128xf32>
    %8 = vector.shape_cast %6 : vector<16x128xf32> to vector<2x8x128xf32>
    %cst = arith.constant dense<0.000000e+00> : vector<8x128xf32>
    %9 = vector.multi_reduction <add>, %8, %cst [0] : vector<2x8x128xf32> to vector<8x128xf32>
    %10 = arith.addf %7, %9 : vector<8x128xf32>
    %c0_6 = arith.constant 0 : index
    %c0_7 = arith.constant 0 : index
    %11 = vector.load %arg4[%c0_6, %c0_7] : memref<8x128xf32, #tpu.memory_space<vmem>>, vector<8x128xf32>
    tpu.vector_store %arg4[%c0_6, %c0_7], %10 {strides = array<i32>} : memref<8x128xf32, #tpu.memory_space<vmem>>, vector<8x128xf32>,
    return
  }
  func.func @transform_0(%arg0: i32, %arg1: i32) -> (i32, i32) {
    %c1_i32 = arith.constant 1 : i32
    %0 = arith.muli %arg0, %c1_i32 : i32
    %1 = arith.addi %0, %arg1 : i32
    %c0_i32 = arith.constant 0 : i32
    %2 = arith.minsi %1, %c0_i32 : i32
    %c0_i32_0 = arith.constant 0 : i32
    %c0_i32_1 = arith.constant 0 : i32
    return %2, %c0_i32_0 : i32, i32
  }
  func.func @transform_1(%arg0: i32, %arg1: i32) -> (i32, i32) {
    %c1_i32 = arith.constant 1 : i32
    %0 = arith.muli %arg0, %c1_i32 : i32
    %1 = arith.addi %0, %arg1 : i32
    %c0_i32 = arith.constant 0 : i32
    %2 = arith.minsi %1, %c0_i32 : i32
    %c0_i32_0 = arith.constant 0 : i32
    %c0_i32_1 = arith.constant 0 : i32
    return %2, %c0_i32_0 : i32, i32
  }
  func.func @transform_2(%arg0: i32, %arg1: i32) -> (i32, i32) {
    %c0_i32 = arith.constant 0 : i32
    %c0_i32_0 = arith.constant 0 : i32
    return %arg0, %c0_i32 : i32, i32
  }
}

</mosaic_0001>

<llo_original>
// kernel: tpu_custom_call.1
$region0: #{tpu_custom_call.1}
  #allocation0 [shape = 'u32[]', space=smem, size = 0x4, offset = 0x4, fixed_abs, tag = 'smem constant byte address 0x4 - core index']
  #allocation1 [shape = 'u32[144,128]{1,0:T(1,128)}', space=vmem, size = 0x12000, scoped, tag = 'internal scratch']
  %s0 = inlined_call_operand.hbm [shape: f32[16,128], index: 0, kind: input, shape index: {}]
  %s1 = inlined_call_operand.hbm [shape: f32[16,128], index: 1, kind: input, shape index: {}]
  %s2 = inlined_call_operand.hbm [shape: f32[8,128], index: 2, kind: output, shape index: {}]
  %s3 = sld [smem:[#allocation0]]
  $region30: #{tpu_custom_call.1} parent=0
    _
  %s5 = ssub.s32 1, %s3
  %s6 = scalar_select 0, %s5, %s3
  $region1: #{tpu_custom_call.1} parent=0
    #allocation2 [shape = 'u8[8192]{0}', space=vmem, size = 0x2000, scoped, tag = 'input window, operand 0, single buffered']
    #allocation3 [shape = 's32[1]{0}', space=sflag, size = 0x4, scoped, tag = 'scoped memory for tpu_custom_call.1']
    #allocation4 [shape = 's32[1]{0}', space=sflag, size = 0x4, scoped, tag = 'scoped memory for tpu_custom_call.1']
    #allocation5 [shape = 'u8[8192]{0}', space=vmem, size = 0x2000, scoped, tag = 'input window, operand 1, single buffered']
    #allocation6 [shape = 's32[1]{0}', space=sflag, size = 0x4, scoped, tag = 'scoped memory for tpu_custom_call.1']
    #allocation7 [shape = 'u8[4096]{0}', space=vmem, size = 0x1000, scoped, tag = 'output window, operand 0, single buffered']
    %7 = vsyncpa [#allocation3], 0
    %8 = vsyncpa [#allocation6], 0
    %9 = vsyncpa [#allocation4], 0
    // Predicated region
    $region2: #{tpu_custom_call.1} parent=1 // pred_check
      _
    $region3: #{tpu_custom_call.1} parent=1 // pred_check_branch
      %11 = sbr.rel (0) target = $region5
    $region4: #{tpu_custom_call.1} parent=1 // pred_region
      %s12 = sadd.s32 0, 0
      %p13 = scmp.lt.s32.totalorder %s12, 0
      %s14 = scalar_select %p13, %s12, 0
      %s15 = smul.u32 2, %s14
      %s17 = ssub.s32 256, 256
      %18 = vsyncadd [#allocation3], %s17
      %s19 = smul.addr %s15, 128
      %s20 = scalar_lea.hbm %s0, %s19
      %s21 = sshll.u32 [#allocation2], 4
      %s22 = int_to_ptr.vmem [resolvable:$true] %s21
      %27 = dma.hbm_to_vmem [thread:$0]  %s20, 256, %s22, [#allocation3], 128, 128, 8
    $region5: #{tpu_custom_call.1} parent=1 // pred_fallthru
      _
    // Predicated region
    $region6: #{tpu_custom_call.1} parent=1 // pred_check
      _
    $region7: #{tpu_custom_call.1} parent=1 // pred_check_branch
      %29 = sbr.rel (0) target = $region9
    $region8: #{tpu_custom_call.1} parent=1 // pred_region
      %s30 = sadd.s32 0, 0
      %p31 = scmp.lt.s32.totalorder %s30, 0
      %s32 = scalar_select %p31, %s30, 0
      %s33 = smul.u32 2, %s32
      %s35 = ssub.s32 256, 256
      %36 = vsyncadd [#allocation6], %s35
      %s37 = smul.addr %s33, 128
      %s38 = scalar_lea.hbm %s1, %s37
      %s39 = sshll.u32 [#allocation5], 4
      %s40 = int_to_ptr.vmem [resolvable:$true] %s39
      %45 = dma.hbm_to_vmem [thread:$0]  %s38, 256, %s40, [#allocation6], 128, 128, 8
    $region9: #{tpu_custom_call.1} parent=1 // pred_fallthru
      _
    // Predicated region
    $region10: #{tpu_custom_call.1} parent=1 // pred_check
      _
    $region11: #{tpu_custom_call.1} parent=1 // pred_check_branch
      %47 = sbr.rel (0) target = $region13
    $region12: #{tpu_custom_call.1} parent=1 // pred_region
      %48 = dma.done [#allocation3], 256
    $region13: #{tpu_custom_call.1} parent=1 // pred_fallthru
      _
    // Predicated region
    $region14: #{tpu_custom_call.1} parent=1 // pred_check
      _
    $region15: #{tpu_custom_call.1} parent=1 // pred_check_branch
      %50 = sbr.rel (0) target = $region17
    $region16: #{tpu_custom_call.1} parent=1 // pred_region
      %51 = dma.done [#allocation6], 256
    $region17: #{tpu_custom_call.1} parent=1 // pred_fallthru
      _
    %s52 = sadd.s32 0, 0
    %p53 = scmp.lt.s32.totalorder %s52, 0
    %s54 = scalar_select %p53, %s52, 0
    %s55 = smul.u32 2, %s54
    %s56 = sadd.s32 0, 0
    %p57 = scmp.lt.s32.totalorder %s56, 0
    %s58 = scalar_select %p57, %s56, 0
    %s59 = smul.u32 2, %s58
    %p60 = scmp.eq.s32.totalorder 0, 0
    // Predicated region
    $region18: #{tpu_custom_call.1} parent=1 // pred_check
      %p61 = pneg %p60
    $region19: #{tpu_custom_call.1} parent=1 // pred_check_branch
      %63 = sbr.rel (%p61) target = $region21
    $region20: #{tpu_custom_call.1} parent=1 // pred_region
      %64 = vst [vmem:[#allocation7] sm:$0xff] 0.0
    $region21: #{tpu_custom_call.1} parent=1 // pred_fallthru
      _
    %v65 = vld [vmem:[#allocation2] sm:$0xff]
    %v66 = vld [vmem:[#allocation2 + $0x8] sm:$0xff]
    %v67 = vld [vmem:[#allocation5] sm:$0xff]
    %v68 = vld [vmem:[#allocation5 + $0x8] sm:$0xff]
    %v69 = vsub.f32 %v65, %v67
    %v70 = vsub.f32 %v66, %v68
    %v71 = vmul.f32 %v69, %v69
    %v72 = vmul.f32 %v70, %v70
    %v73 = vld [vmem:[#allocation7] sm:$0xff]
    %v74 = vadd.f32 %v71, %v72
    %v75 = vadd.f32 %v73, %v74
    %76 = vst [vmem:[#allocation7] sm:$0xff] %v75
    // Predicated region
    $region22: #{tpu_custom_call.1} parent=1 // pred_check
      _
    $region23: #{tpu_custom_call.1} parent=1 // pred_check_branch
      %78 = sbr.rel (0) target = $region25
    $region24: #{tpu_custom_call.1} parent=1 // pred_region
      %s80 = ssub.s32 128, 128
      %81 = vsyncadd [#allocation4], %s80
      %s83 = sshll.u32 [#allocation7], 4
      %s84 = int_to_ptr.vmem [resolvable:$true] %s83
      %86 = dma.vmem_to_hbm [thread:$0]  %s84, 128, %s2, [#allocation4]
    $region25: #{tpu_custom_call.1} parent=1 // pred_fallthru
      _
    // Predicated region
    $region26: #{tpu_custom_call.1} parent=1 // pred_check
      _
    $region27: #{tpu_custom_call.1} parent=1 // pred_check_branch
      %88 = sbr.rel (0) target = $region29
    $region28: #{tpu_custom_call.1} parent=1 // pred_region
      %89 = dma.done [#allocation4], 128
    $region29: #{tpu_custom_call.1} parent=1 // pred_fallthru
      _
    %90 = vsyncpa [#allocation3], 1
    %91 = vsyncpa [#allocation6], 1
    %92 = vsyncpa [#allocation4], 1

</llo_original>
